<compile_context>
chip_gen: v5e
topology: v5e:2x2
jax: 0.10.0
libtpu: 0.0.40
codegen_flags: <defaults>
</compile_context>

<pallas_src>
import jax
import jax.numpy as jnp
from jax.experimental import pallas as pl
from jax.experimental.pallas import tpu as pltpu


def _cbam_kernel(x_ref, w1_ref, b1_ref, w2_ref, b2_ref, k_ref, bsp_ref, o_ref):
    x = x_ref[...].astype(jnp.float32)                    # (NB, C, HW), lane-dense
    NB, C, HW = x.shape

    # ---------- channel attention: global avg pool + tiny MLP on VPU/XLU ----------
    avg = jnp.sum(x, axis=-1) * (1.0 / HW)                                  # (NB, C)
    # (NB,C)@(C,Cr) and (NB,Cr)@(Cr,C) are far too small for the MXU; do them as
    # broadcast-mul + reduce (VPU + XLU) to avoid two MXU push/drain round trips.
    h = jnp.sum(avg[:, :, None] * w1_ref[...][None, :, :], axis=1) + b1_ref[...]
    h = jnp.maximum(h, 0.0)                                                 # (NB, Cr)
    ca = jnp.sum(h[:, :, None] * w2_ref[...][None, :, :], axis=1) + b2_ref[...]
    ca = jax.nn.sigmoid(ca)                                                 # (NB, C)
    x_ca = x * ca[:, :, None]                                               # (NB, C, HW)

    # ---------- spatial attention: fused 7x7 conv as a single bf16 MXU matmul ------
    mx = jnp.max(x_ca, axis=1)                                              # (NB, HW)
    av = jnp.sum(x_ca, axis=1) * (1.0 / C)                                  # (NB, HW)
    pooled = jnp.concatenate([mx, av], axis=-1).astype(jnp.bfloat16)        # (NB, 2*HW)
    logits = jnp.dot(pooled, k_ref[...],
                     preferred_element_type=jnp.float32) + bsp_ref[...]     # (NB, HW)
    sa = jax.nn.sigmoid(logits)

    o_ref[...] = (x_ca * sa[:, None, :]).astype(o_ref.dtype)


def _spatial_conv_matrix(w_sp, H, W):
    """Dense (2*HW, HW) matrix realizing the 7x7 / padding=3 conv on [max, avg].

    K[c][p, q] = w_sp[c, y'-y+3, x'-x+3] for p=(y',x'), q=(y,x) inside the 7x7
    window, else 0, so that  conv_out_flat = mx_flat @ K[0] + av_flat @ K[1]
                                           = concat([mx, av], -1) @ vstack(K).
    """
    ky = jnp.arange(H)[:, None] - jnp.arange(H)[None, :] + 3     # (H, H): y'-y+3
    kx = jnp.arange(W)[:, None] - jnp.arange(W)[None, :] + 3     # (W, W): x'-x+3
    vy = (ky >= 0) & (ky <= 6)
    vx = (kx >= 0) & (kx <= 6)
    kyc = jnp.clip(ky, 0, 6)
    kxc = jnp.clip(kx, 0, 6)
    K = w_sp[:, kyc[:, None, :, None], kxc[None, :, None, :]]    # (2, H, W, H, W)
    mask = vy[:, None, :, None] & vx[None, :, None, :]           # (H, W, H, W)
    K = jnp.where(mask[None], K, 0.0).astype(jnp.float32)
    return K.reshape(2 * H * W, H * W)                           # [K_max; K_avg]


def _num_tensorcores_per_chip():
    """2 on v7x (dual TensorCore), else 1. Conservative fallback on failure."""
    try:
        kind = jax.devices()[0].device_kind.lower()
        if "v7" in kind or "7x" in kind:
            return 2
    except Exception:
        pass
    return 1


def cbam_pallas(x_nchw, params, block_n=None):
    w1, b1, w2, b2, w_sp, b_sp = params
    N, C, H, W = x_nchw.shape
    HW = H * W
    Cr = w1.shape[1]

    # Lane-dense last dim (HW); keep x's native dtype for the HBM<->VMEM format.
    x = x_nchw.reshape(N, C, HW)
    out_dtype = x.dtype

    # Fused bf16 conv matrix (halves the dominant K DMA, native-rate MXU matmul;
    # accumulation stays f32 inside the kernel).
    k_fused = _spatial_conv_matrix(w_sp.astype(jnp.float32), H, W).astype(jnp.bfloat16)
    bsp = b_sp.reshape(1, 1).astype(jnp.float32)

    if block_n is None:
        n_cores = _num_tensorcores_per_chip()
        if n_cores > 1 and N >= n_cores and N % n_cores == 0:
            block_n = N // n_cores        # engage both v7x TensorCores
        else:
            block_n = N                   # whole batch per step on v5e/v6e
    assert N % block_n == 0

    # ---- VMEM footprint guard: dense K grows as HW^2 (v7x physical VMEM = 64 MiB) ----
    kb = k_fused.size * k_fused.dtype.itemsize
    xb = block_n * C * HW * jnp.dtype(out_dtype).itemsize
    vmem_est = 4 * xb + 2 * kb + (1 << 16)        # 2x-buffered x in/out + K + weights
    if vmem_est > 48 * 1024 * 1024:
        # TODO(synk): strip-tiled roll/shifted-MAC spatial conv for large H*W where the
        # dense (2*HW, HW) matrix no longer fits VMEM (especially v7x's 64 MiB).
        raise NotImplementedError(
            f"dense spatial-conv path needs ~{vmem_est >> 20} MiB VMEM; too large")
    compiler_kwargs = dict(dimension_semantics=("parallel",))
    if vmem_est > 24 * 1024 * 1024:               # above default scoped-VMEM comfort zone
        compiler_kwargs["vmem_limit_bytes"] = int(min(56 * 1024 * 1024, 2 * vmem_est))

    out = pl.pallas_call(
        _cbam_kernel,
        out_shape=jax.ShapeDtypeStruct((N, C, HW), out_dtype),
        grid_spec=pltpu.PrefetchScalarGridSpec(
            num_scalar_prefetch=0,
            grid=(N // block_n,),
            in_specs=[
                pl.BlockSpec((block_n, C, HW), lambda n: (n, 0, 0)),   # x (native dtype)
                pl.BlockSpec((C, Cr), lambda n: (0, 0)),               # w1 (f32)
                pl.BlockSpec((1, Cr), lambda n: (0, 0)),               # b1
                pl.BlockSpec((Cr, C), lambda n: (0, 0)),               # w2
                pl.BlockSpec((1, C), lambda n: (0, 0)),                # b2
                pl.BlockSpec((2 * HW, HW), lambda n: (0, 0)),          # fused K (bf16)
                pl.BlockSpec((1, 1), lambda n: (0, 0)),                # spatial bias
            ],
            out_specs=pl.BlockSpec((block_n, C, HW), lambda n: (n, 0, 0)),
        ),
        compiler_params=pltpu.CompilerParams(**compiler_kwargs),
    )(x, w1.astype(jnp.float32), b1.astype(jnp.float32),
      w2.astype(jnp.float32), b2.astype(jnp.float32), k_fused, bsp)
    return out.reshape(N, C, H, W)


def cbam_ref(x_nchw, params):
    """Plain-JAX f32 reference matching the PyTorch forward (correctness check)."""
    w1, b1, w2, b2, w_sp, b_sp = params
    x = jnp.transpose(x_nchw.astype(jnp.float32), (0, 2, 3, 1))         # NHWC
    avg = jnp.mean(x, axis=(1, 2))                                      # (N, C)
    h = jnp.maximum(avg @ w1 + b1, 0.0)
    ca = jax.nn.sigmoid(h @ w2 + b2)                                    # (N, C)
    x = x * ca[:, None, None, :]
    mx = jnp.max(x, axis=-1, keepdims=True)
    av = jnp.mean(x, axis=-1, keepdims=True)
    sp_in = jnp.concatenate([mx, av], axis=-1)                          # (N, H, W, 2)
    w_hwio = jnp.transpose(w_sp, (1, 2, 0))[..., None]                  # (7, 7, 2, 1)
    sa = jax.lax.conv_general_dilated(
        sp_in, w_hwio, (1, 1), 'SAME',
        dimension_numbers=('NHWC', 'HWIO', 'NHWC')) + b_sp
    sa = jax.nn.sigmoid(sa)
    out = x * sa
    return jnp.transpose(out, (0, 3, 1, 2))


if __name__ == "__main__":
    key = jax.random.PRNGKey(0)
    N, C, H, W = 2, 32, 16, 16
    reduction_ratio = 16
    Cr = C // reduction_ratio                       # 2

    ks = jax.random.split(key, 7)
    x = jax.random.normal(ks[0], (N, C, H, W), jnp.float32)
    # nn.Conv2d(C, Cr, 1) weight (Cr, C, 1, 1) is equivalent to a matmul with (C, Cr)
    w1 = jax.random.normal(ks[1], (C, Cr), jnp.float32) * 0.1
    b1 = jax.random.normal(ks[2], (1, Cr), jnp.float32) * 0.1
    w2 = jax.random.normal(ks[3], (Cr, C), jnp.float32) * 0.1
    b2 = jax.random.normal(ks[4], (1, C), jnp.float32) * 0.1
    # nn.Conv2d(2, 1, 7, padding=3) weight stored as (in_ch=2, kh=7, kw=7)
    w_sp = jax.random.normal(ks[5], (2, 7, 7), jnp.float32) * 0.1
    b_sp = jax.random.normal(ks[6], (1,), jnp.float32) * 0.1
    params = (w1, b1, w2, b2, w_sp, b_sp)

    out = jax.block_until_ready(cbam_pallas(x, params))
    ref = jax.block_until_ready(cbam_ref(x, params))

    assert out.shape == (N, C, H, W), out.shape
    err = float(jnp.max(jnp.abs(out - ref)))
    # Tolerance accounts for the bf16 spatial-conv matrix / operands (f32 accumulation).
    assert jnp.allclose(out, ref, atol=1e-2, rtol=1e-2), f"max abs err = {err}"
    print("KERNEL_OK")
</pallas_src>

<mosaic_0001>
module attributes {stable_mosaic.version = 11 : i64} {
  func.func @_cbam_kernel(%arg0: i32, %arg1: memref<2x32x256xf32, #tpu.memory_space<vmem>>, %arg2: memref<32x2xf32, #tpu.memory_space<vmem>>, %arg3: memref<1x2xf32, #tpu.memory_space<vmem>>, %arg4: memref<2x32xf32, #tpu.memory_space<vmem>>, %arg5: memref<1x32xf32, #tpu.memory_space<vmem>>, %arg6: memref<512x256xbf16, #tpu.memory_space<vmem>>, %arg7: memref<1x1xf32, #tpu.memory_space<vmem>>, %arg8: memref<2x32x256xf32, #tpu.memory_space<vmem>>) attributes {dimension_semantics = [#tpu.dimension_semantics<parallel>], iteration_bounds = array<i64: 1>, scalar_prefetch = 0 : i64, scratch_operands = 0 : i64, tpu.core_type = #tpu.core_type<tc>, window_params = [{transform_indices = @transform_0, window_bounds = array<i64: 2, 32, 256>}, {pipeline_mode = #tpu.pipeline_mode<synchronous>, transform_indices = @transform_1, window_bounds = array<i64: 32, 2>}, {pipeline_mode = #tpu.pipeline_mode<synchronous>, transform_indices = @transform_2, window_bounds = array<i64: 1, 2>}, {pipeline_mode = #tpu.pipeline_mode<synchronous>, transform_indices = @transform_3, window_bounds = array<i64: 2, 32>}, {pipeline_mode = #tpu.pipeline_mode<synchronous>, transform_indices = @transform_4, window_bounds = array<i64: 1, 32>}, {pipeline_mode = #tpu.pipeline_mode<synchronous>, transform_indices = @transform_5, window_bounds = array<i64: 512, 256>}, {pipeline_mode = #tpu.pipeline_mode<synchronous>, transform_indices = @transform_6, window_bounds = array<i64: 1, 1>}, {transform_indices = @transform_7, window_bounds = array<i64: 2, 32, 256>}]} {
    %c0 = arith.constant 0 : index
    %c0_0 = arith.constant 0 : index
    %c0_1 = arith.constant 0 : index
    %0 = vector.load %arg1[%c0, %c0_0, %c0_1] : memref<2x32x256xf32, #tpu.memory_space<vmem>>, vector<2x32x256xf32>
    %cst = arith.constant dense<0.000000e+00> : vector<2x32xf32>
    %1 = vector.multi_reduction <add>, %0, %cst [2] : vector<2x32x256xf32> to vector<2x32xf32>
    %cst_2 = arith.constant 3.906250e-03 : f32
    %2 = vector.broadcast %cst_2 : f32 to vector<2x32xf32>
    %3 = arith.mulf %1, %2 : vector<2x32xf32>
    %4 = vector.shape_cast %3 : vector<2x32xf32> to vector<2x32x1xf32>
    %c0_3 = arith.constant 0 : index
    %c0_4 = arith.constant 0 : index
    %5 = vector.load %arg2[%c0_3, %c0_4] : memref<32x2xf32, #tpu.memory_space<vmem>>, vector<32x2xf32>
    %6 = vector.shape_cast %5 : vector<32x2xf32> to vector<1x32x2xf32>
    %7 = vector.broadcast %4 : vector<2x32x1xf32> to vector<2x32x2xf32>
    %8 = vector.broadcast %6 : vector<1x32x2xf32> to vector<2x32x2xf32>
    %9 = arith.mulf %7, %8 : vector<2x32x2xf32>
    %cst_5 = arith.constant dense<0.000000e+00> : vector<2x2xf32>
    %10 = vector.multi_reduction <add>, %9, %cst_5 [1] : vector<2x32x2xf32> to vector<2x2xf32>
    %c0_6 = arith.constant 0 : index
    %c0_7 = arith.constant 0 : index
    %11 = vector.load %arg3[%c0_6, %c0_7] : memref<1x2xf32, #tpu.memory_space<vmem>>, vector<1x2xf32>
    %12 = vector.broadcast %11 : vector<1x2xf32> to vector<2x2xf32>
    %13 = arith.addf %10, %12 : vector<2x2xf32>
    %cst_8 = arith.constant 0.000000e+00 : f32
    %14 = vector.broadcast %cst_8 : f32 to vector<2x2xf32>
    %15 = arith.maximumf %13, %14 : vector<2x2xf32>
    %16 = vector.shape_cast %15 : vector<2x2xf32> to vector<2x2x1xf32>
    %c0_9 = arith.constant 0 : index
    %c0_10 = arith.constant 0 : index
    %17 = vector.load %arg4[%c0_9, %c0_10] : memref<2x32xf32, #tpu.memory_space<vmem>>, vector<2x32xf32>
    %18 = vector.shape_cast %17 : vector<2x32xf32> to vector<1x2x32xf32>
    %19 = vector.broadcast %16 : vector<2x2x1xf32> to vector<2x2x32xf32>
    %20 = vector.broadcast %18 : vector<1x2x32xf32> to vector<2x2x32xf32>
    %21 = arith.mulf %19, %20 : vector<2x2x32xf32>
    %cst_11 = arith.constant dense<0.000000e+00> : vector<2x32xf32>
    %22 = vector.multi_reduction <add>, %21, %cst_11 [1] : vector<2x2x32xf32> to vector<2x32xf32>
    %c0_12 = arith.constant 0 : index
    %c0_13 = arith.constant 0 : index
    %23 = vector.load %arg5[%c0_12, %c0_13] : memref<1x32xf32, #tpu.memory_space<vmem>>, vector<1x32xf32>
    %24 = vector.broadcast %23 : vector<1x32xf32> to vector<2x32xf32>
    %25 = arith.addf %22, %24 : vector<2x32xf32>
    %26 = arith.negf %25 : vector<2x32xf32>
    %27 = math.exp %26 : vector<2x32xf32>
    %cst_14 = arith.constant 1.000000e+00 : f32
    %28 = vector.broadcast %cst_14 : f32 to vector<2x32xf32>
    %29 = arith.addf %28, %27 : vector<2x32xf32>
    %30 = arith.divf %28, %29 : vector<2x32xf32>
    %31 = vector.shape_cast %30 : vector<2x32xf32> to vector<2x32x1xf32>
    %32 = vector.broadcast %31 : vector<2x32x1xf32> to vector<2x32x256xf32>
    %33 = arith.mulf %0, %32 : vector<2x32x256xf32>
    %cst_15 = arith.constant dense<0xFF800000> : vector<2x256xf32>
    %34 = vector.multi_reduction <maximumf>, %33, %cst_15 [1] : vector<2x32x256xf32> to vector<2x256xf32>
    %cst_16 = arith.constant dense<0.000000e+00> : vector<2x256xf32>
    %35 = vector.multi_reduction <add>, %33, %cst_16 [1] : vector<2x32x256xf32> to vector<2x256xf32>
    %cst_17 = arith.constant 3.125000e-02 : f32
    %36 = vector.broadcast %cst_17 : f32 to vector<2x256xf32>
    %37 = arith.mulf %35, %36 : vector<2x256xf32>
    %38 = tpu.concatenate %34, %37 in 1 : vector<2x256xf32>, vector<2x256xf32> -> vector<2x512xf32>
    %39 = arith.truncf %38 : vector<2x512xf32> to vector<2x512xbf16>
    %c0_18 = arith.constant 0 : index
    %c0_19 = arith.constant 0 : index
    %40 = vector.load %arg6[%c0_18, %c0_19] : memref<512x256xbf16, #tpu.memory_space<vmem>>, vector<512x256xbf16>
    %cst_20 = arith.constant dense<0.000000e+00> : vector<2x256xf32>
    %41 = tpu.matmul %39, %40, %cst_20 {dimension_numbers = #tpu.dot_dimension_numbers<[1], [0], [0], [1], [0, 0, 1, 1], [], []>} : vector<2x512xbf16>, vector<512x256xbf16>, vector<2x256xf32> -> vector<2x256xf32>
    %c0_21 = arith.constant 0 : index
    %c0_22 = arith.constant 0 : index
    %42 = vector.load %arg7[%c0_21, %c0_22] : memref<1x1xf32, #tpu.memory_space<vmem>>, vector<1x1xf32>
    %43 = vector.broadcast %42 : vector<1x1xf32> to vector<2x256xf32>
    %44 = arith.addf %41, %43 : vector<2x256xf32>
    %45 = arith.negf %44 : vector<2x256xf32>
    %46 = math.exp %45 : vector<2x256xf32>
    %cst_23 = arith.constant 1.000000e+00 : f32
    %47 = vector.broadcast %cst_23 : f32 to vector<2x256xf32>
    %48 = arith.addf %47, %46 : vector<2x256xf32>
    %49 = arith.divf %47, %48 : vector<2x256xf32>
    %50 = vector.shape_cast %49 : vector<2x256xf32> to vector<2x1x256xf32>
    %51 = vector.broadcast %50 : vector<2x1x256xf32> to vector<2x32x256xf32>
    %52 = arith.mulf %33, %51 : vector<2x32x256xf32>
    %c0_24 = arith.constant 0 : index
    %c0_25 = arith.constant 0 : index
    %c0_26 = arith.constant 0 : index
    %53 = vector.load %arg8[%c0_24, %c0_25, %c0_26] : memref<2x32x256xf32, #tpu.memory_space<vmem>>, vector<2x32x256xf32>
    tpu.vector_store %arg8[%c0_24, %c0_25, %c0_26], %52 {strides = array<i32>} : memref<2x32x256xf32, #tpu.memory_space<vmem>>, vector<2x32x256xf32>,
    return
  }
  func.func @transform_0(%arg0: i32) -> (i32, i32, i32) {
    %c0_i32 = arith.constant 0 : i32
    %c0_i32_0 = arith.constant 0 : i32
    %c0_i32_1 = arith.constant 0 : i32
    return %arg0, %c0_i32, %c0_i32_0 : i32, i32, i32
  }
  func.func @transform_1(%arg0: i32) -> (i32, i32) {
    %c0_i32 = arith.constant 0 : i32
    %c0_i32_0 = arith.constant 0 : i32
    %c0_i32_1 = arith.constant 0 : i32
    return %c0_i32, %c0_i32_0 : i32, i32
  }
  func.func @transform_2(%arg0: i32) -> (i32, i32) {
    %c0_i32 = arith.constant 0 : i32
    %c0_i32_0 = arith.constant 0 : i32
    %c0_i32_1 = arith.constant 0 : i32
    return %c0_i32, %c0_i32_0 : i32, i32
  }
  func.func @transform_3(%arg0: i32) -> (i32, i32) {
    %c0_i32 = arith.constant 0 : i32
    %c0_i32_0 = arith.constant 0 : i32
    %c0_i32_1 = arith.constant 0 : i32
    return %c0_i32, %c0_i32_0 : i32, i32
  }
  func.func @transform_4(%arg0: i32) -> (i32, i32) {
    %c0_i32 = arith.constant 0 : i32
    %c0_i32_0 = arith.constant 0 : i32
    %c0_i32_1 = arith.constant 0 : i32
    return %c0_i32, %c0_i32_0 : i32, i32
  }
  func.func @transform_5(%arg0: i32) -> (i32, i32) {
    %c0_i32 = arith.constant 0 : i32
    %c0_i32_0 = arith.constant 0 : i32
    %c0_i32_1 = arith.constant 0 : i32
    return %c0_i32, %c0_i32_0 : i32, i32
  }
  func.func @transform_6(%arg0: i32) -> (i32, i32) {
    %c0_i32 = arith.constant 0 : i32
    %c0_i32_0 = arith.constant 0 : i32
    %c0_i32_1 = arith.constant 0 : i32
    return %c0_i32, %c0_i32_0 : i32, i32
  }
  func.func @transform_7(%arg0: i32) -> (i32, i32, i32) {
    %c0_i32 = arith.constant 0 : i32
    %c0_i32_0 = arith.constant 0 : i32
    %c0_i32_1 = arith.constant 0 : i32
    return %arg0, %c0_i32, %c0_i32_0 : i32, i32, i32
  }
}

</mosaic_0001>

<llo_original>
// kernel: tpu_custom_call.1
$region0: #{tpu_custom_call.1}
  #allocation0 [shape = 'u32[]', space=smem, size = 0x4, offset = 0x4, fixed_abs, tag = 'smem constant byte address 0x4 - core index']
  #allocation1 [shape = 'u32[72,128]{1,0:T(1,128)}', space=vmem, size = 0x9000, scoped, tag = 'internal scratch']
  #allocation2 [shape = 'f32[1,1]{1,0:T(1,128)S(1)}', space=vmem, size = 0x200, scoped, tag = 'scoped memory for tpu_custom_call.1']
  %s0 = inlined_call_operand.hbm [shape: f32[2,32,256], index: 0, kind: input, shape index: {}]
  %s1 = inlined_call_operand.vmem [shape: f32[32,2], index: 1, kind: input, shape index: {}]
  %s2 = inlined_call_operand.vmem [shape: f32[1,2], index: 2, kind: input, shape index: {}]
  %s3 = inlined_call_operand.vmem [shape: f32[2,32], index: 3, kind: input, shape index: {}]
  %s4 = inlined_call_operand.vmem [shape: f32[1,32], index: 4, kind: input, shape index: {}]
  %s5 = inlined_call_operand.hbm [shape: bf16[512,256], index: 5, kind: input, shape index: {}]
  %s6 = inlined_call_operand.<no memory space> [shape: f32[1,1], index: 6, kind: input, shape index: {}]
  %s7 = inlined_call_operand.hbm [shape: f32[2,32,256], index: 7, kind: output, shape index: {}]
  %s8 = sld [smem:[#allocation0]]
  $region46: #{tpu_custom_call.1} parent=0
    _
  %s10 = ssub.s32 1, %s8
  %s11 = scalar_select 0, %s10, %s8
  %v12 = vstv %s6
  %13 = vst [vmem:[#allocation2] sm:$0x1] %v12
  $region1: #{tpu_custom_call.1} parent=0
    #allocation3 [shape = 'u8[65536]{0}', space=vmem, size = 0x10000, scoped, tag = 'input window, operand 0, single buffered']
    #allocation4 [shape = 's32[1]{0}', space=sflag, size = 0x4, scoped, tag = 'scoped memory for tpu_custom_call.1']
    #allocation5 [shape = 's32[1]{0}', space=sflag, size = 0x4, scoped, tag = 'scoped memory for tpu_custom_call.1']
    #allocation6 [shape = 'u8[262144]{0}', space=vmem, size = 0x40000, scoped, tag = 'input window, operand 5, single buffered']
    #allocation7 [shape = 's32[1]{0}', space=sflag, size = 0x4, scoped, tag = 'scoped memory for tpu_custom_call.1']
    #allocation8 [shape = 'u8[65536]{0}', space=vmem, size = 0x10000, scoped, tag = 'output window, operand 0, single buffered']
    %14 = vsyncpa [#allocation4], 0
    %15 = vsyncpa [#allocation7], 0
    %16 = vsyncpa [#allocation5], 0
    // Predicated region
    $region2: #{tpu_custom_call.1} parent=1 // pred_check
      _
    $region3: #{tpu_custom_call.1} parent=1 // pred_check_branch
      %18 = sbr.rel (0) target = $region5
    $region4: #{tpu_custom_call.1} parent=1 // pred_region
      %20 = vsyncadd [#allocation4], 0
      %s21 = sshll.u32 %s0, 4
      %s22 = int_to_ptr.hbm [resolvable:$true] %s21
      %s23 = sshll.u32 [#allocation3], 4
      %s24 = int_to_ptr.vmem [resolvable:$true] %s23
      %29 = dma.hbm_to_vmem [thread:$0]  %s22, 2048, %s24, [#allocation4], 256, 256, 16
    $region5: #{tpu_custom_call.1} parent=1 // pred_fallthru
      _
    // Predicated region
    $region6: #{tpu_custom_call.1} parent=1 // pred_check
      _
    $region7: #{tpu_custom_call.1} parent=1 // pred_check_branch
      %31 = sbr.rel (0) target = $region9
    $region8: #{tpu_custom_call.1} parent=1 // pred_region
      _
    $region9: #{tpu_custom_call.1} parent=1 // pred_fallthru
      _
    // Predicated region
    $region10: #{tpu_custom_call.1} parent=1 // pred_check
      _
    $region11: #{tpu_custom_call.1} parent=1 // pred_check_branch
      %33 = sbr.rel (0) target = $region13
    $region12: #{tpu_custom_call.1} parent=1 // pred_region
      _
    $region13: #{tpu_custom_call.1} parent=1 // pred_fallthru
      _
    // Predicated region
    $region14: #{tpu_custom_call.1} parent=1 // pred_check
      _
    $region15: #{tpu_custom_call.1} parent=1 // pred_check_branch
      %35 = sbr.rel (0) target = $region17
    $region16: #{tpu_custom_call.1} parent=1 // pred_region
      _
    $region17: #{tpu_custom_call.1} parent=1 // pred_fallthru
      _
    // Predicated region
    $region18: #{tpu_custom_call.1} parent=1 // pred_check
      _
    $region19: #{tpu_custom_call.1} parent=1 // pred_check_branch
      %37 = sbr.rel (0) target = $region21
    $region20: #{tpu_custom_call.1} parent=1 // pred_region
      _
    $region21: #{tpu_custom_call.1} parent=1 // pred_fallthru
      _
    // Predicated region
    $region22: #{tpu_custom_call.1} parent=1 // pred_check
      _
    $region23: #{tpu_custom_call.1} parent=1 // pred_check_branch
      %39 = sbr.rel (0) target = $region25
    $region24: #{tpu_custom_call.1} parent=1 // pred_region
      %41 = vsyncadd [#allocation7], 0
      %s42 = sshll.u32 %s5, 4
      %s43 = int_to_ptr.hbm [resolvable:$true] %s42
      %s44 = sshll.u32 [#allocation6], 4
      %s45 = int_to_ptr.vmem [resolvable:$true] %s44
      %50 = dma.hbm_to_vmem [thread:$0]  %s43, 8192, %s45, [#allocation7], 128, 128, 8
    $region25: #{tpu_custom_call.1} parent=1 // pred_fallthru
      _
    // Predicated region
    $region26: #{tpu_custom_call.1} parent=1 // pred_check
      _
    $region27: #{tpu_custom_call.1} parent=1 // pred_check_branch
      %52 = sbr.rel (0) target = $region29
    $region28: #{tpu_custom_call.1} parent=1 // pred_region
      _
    $region29: #{tpu_custom_call.1} parent=1 // pred_fallthru
      _
    // Predicated region
    $region30: #{tpu_custom_call.1} parent=1 // pred_check
      _
    $region31: #{tpu_custom_call.1} parent=1 // pred_check_branch
      %54 = sbr.rel (0) target = $region33
    $region32: #{tpu_custom_call.1} parent=1 // pred_region
      %56 = dma.done [#allocation4], 2048
    $region33: #{tpu_custom_call.1} parent=1 // pred_fallthru
      _
    // Predicated region
    $region34: #{tpu_custom_call.1} parent=1 // pred_check
      _
    $region35: #{tpu_custom_call.1} parent=1 // pred_check_branch
      %58 = sbr.rel (0) target = $region37
    $region36: #{tpu_custom_call.1} parent=1 // pred_region
      %60 = dma.done [#allocation7], 8192
    $region37: #{tpu_custom_call.1} parent=1 // pred_fallthru
      _
    %v61 = vld [vmem:[#allocation3] sm:$0xff]
    %v62 = vld [vmem:[#allocation3 + $0x8] sm:$0xff]
    %v63 = vld [vmem:[#allocation3 + $0x10] sm:$0xff]
    %v64 = vld [vmem:[#allocation3 + $0x18] sm:$0xff]
    %v65 = vld [vmem:[#allocation3 + $0x20] sm:$0xff]
    %v66 = vld [vmem:[#allocation3 + $0x28] sm:$0xff]
    %v67 = vld [vmem:[#allocation3 + $0x30] sm:$0xff]
    %v68 = vld [vmem:[#allocation3 + $0x38] sm:$0xff]
    %v69 = vld [vmem:[#allocation3 + $0x40] sm:$0xff]
    %v70 = vld [vmem:[#allocation3 + $0x48] sm:$0xff]
    %v71 = vld [vmem:[#allocation3 + $0x50] sm:$0xff]
    %v72 = vld [vmem:[#allocation3 + $0x58] sm:$0xff]
    %v73 = vld [vmem:[#allocation3 + $0x60] sm:$0xff]
    %v74 = vld [vmem:[#allocation3 + $0x68] sm:$0xff]
    %v75 = vld [vmem:[#allocation3 + $0x70] sm:$0xff]
    %v76 = vld [vmem:[#allocation3 + $0x78] sm:$0xff]
    %v77 = vadd.f32 %v61, %v62
    %78 = vadd.xlane.f32.xlu0 %v77
    %v79 = vpop.xlane.xlu0 %78
    %v80 = vadd.f32 %v63, %v64
    %81 = vadd.xlane.f32.xlu0 %v80
    %v82 = vpop.xlane.xlu0 %81
    %v83 = vadd.f32 %v65, %v66
    %84 = vadd.xlane.f32.xlu0 %v83
    %v85 = vpop.xlane.xlu0 %84
    %v86 = vadd.f32 %v67, %v68
    %87 = vadd.xlane.f32.xlu0 %v86
    %v88 = vpop.xlane.xlu0 %87
    %v89 = vadd.f32 %v69, %v70
    %90 = vadd.xlane.f32.xlu0 %v89
    %v91 = vpop.xlane.xlu0 %90
    %v92 = vadd.f32 %v71, %v72
    %93 = vadd.xlane.f32.xlu0 %v92
    %v94 = vpop.xlane.xlu0 %93
    %v95 = vadd.f32 %v73, %v74
    %96 = vadd.xlane.f32.xlu0 %v95
    %v97 = vpop.xlane.xlu0 %96
    %v98 = vadd.f32 %v75, %v76
    %99 = vadd.xlane.f32.xlu0 %v98
    %v100 = vpop.xlane.xlu0 %99
    %v101 = vmul.f32 %v79, 0.00390625
    %v102 = vmul.f32 %v82, 0.00390625
    %v103 = vmul.f32 %v85, 0.00390625
    %v104 = vmul.f32 %v88, 0.00390625
    %v105 = vmul.f32 %v91, 0.00390625
    %v106 = vmul.f32 %v94, 0.00390625
    %v107 = vmul.f32 %v97, 0.00390625
    %v108 = vmul.f32 %v100, 0.00390625
    %v109 = vld [vmem:[%s1] sm:$0xff]
    %v110 = vld [vmem:[%s1 + $0x8] sm:$0xff]
    %v111 = vld [vmem:[%s1 + $0x10] sm:$0xff]
    %v112 = vld [vmem:[%s1 + $0x18] sm:$0xff]
    %v113 = vmul.f32 %v101, %v109
    %v114 = vmul.f32 %v102, %v110
    %v115 = vmul.f32 %v103, %v111
    %v116 = vmul.f32 %v104, %v112
    %v117 = vmul.f32 %v105, %v109
    %v118 = vmul.f32 %v106, %v110
    %v119 = vmul.f32 %v107, %v111
    %v120 = vmul.f32 %v108, %v112
    %vm121 = vcmask 15360
    %v122 = vsel %vm121, %v113, 0.0
    %v123 = vsel %vm121, %v114, 0.0
    %v124 = vadd.f32 %v122, %v123
    %v125 = vsel %vm121, %v115, 0.0
    %v126 = vadd.f32 %v124, %v125
    %v127 = vsel %vm121, %v116, 0.0
    %v128 = vadd.f32 %v126, %v127
    %v129 = vrot.slane %v128, 4
    %v130 = vadd.f32 %v128, %v129
    %v131 = vrot.slane %v130, 2
    %v132 = vadd.f32 %v130, %v131
    %v133 = vrot.slane %v132, 1
    %v134 = vadd.f32 %v132, %v133
    %v135 = vsel %vm121, %v117, 0.0
    %v136 = vsel %vm121, %v118, 0.0
    %v137 = vadd.f32 %v135, %v136
    %v138 = vsel %vm121, %v119, 0.0
    %v139 = vadd.f32 %v137, %v138
    %v140 = vsel %vm121, %v120, 0.0
    %v141 = vadd.f32 %v139, %v140
    %v142 = vrot.slane %v141, 4
    %v143 = vadd.f32 %v141, %v142
    %v144 = vrot.slane %v143, 2
    %v145 = vadd.f32 %v143, %v144
    %v146 = vrot.slane %v145, 1
    %v147 = vadd.f32 %v145, %v146
    %v148 = vld [vmem:[%s2] sm:$0x1]
    %v150 = vperm.slane %v148, 0
    %v152 = vadd.f32 %v134, %v150
    %v153 = vadd.f32 %v147, %v150
    %v154 = vmax.f32 %v152, 0.0
    %v155 = vmax.f32 %v153, 0.0
    %v156 = vperm.slane %v154, 0
    %v157 = vlaneseq
    %v158 = vshrl.u32 %v157, 7
    %160 = vset.pattern.permute.xlu0 %v158
    %161 = vperm.xlu0 %160, %v156
    %v162 = vpop.permute.xlu0 %161
    %v163 = vperm.slane %v155, 0
    %v164 = vlaneseq
    %v165 = vshrl.u32 %v164, 7
    %167 = vset.pattern.permute.xlu0 %v165
    %168 = vperm.xlu0 %167, %v163
    %v169 = vpop.permute.xlu0 %168
    %v170 = vld [vmem:[%s3] sm:$0x3]
    %v171 = vmul.f32 %v162, %v170
    %v172 = vmul.f32 %v169, %v170
    %vm173 = vcmask 254976
    %v174 = vsel %vm173, %v171, 0.0
    %v175 = vrot.slane %v174, 4
    %v176 = vadd.f32 %v174, %v175
    %v177 = vrot.slane %v176, 2
    %v178 = vadd.f32 %v176, %v177
    %v179 = vrot.slane %v178, 1
    %v180 = vadd.f32 %v178, %v179
    %v181 = vsel %vm173, %v172, 0.0
    %v182 = vrot.slane %v181, 4
    %v183 = vadd.f32 %v181, %v182
    %v184 = vrot.slane %v183, 2
    %v185 = vadd.f32 %v183, %v184
    %v186 = vrot.slane %v185, 1
    %v187 = vadd.f32 %v185, %v186
    %v188 = vld [vmem:[%s4] sm:$0x1]
    %v190 = vperm.slane %v188, 0
    %v192 = vadd.f32 %v180, %v190
    %v193 = vadd.f32 %v187, %v190
    %v194 = vxor.u32 %v192, 2147483648
    %v195 = vxor.u32 %v193, 2147483648
    %v196 = vmul.f32 %v194, 1.442695
    %v197 = vpow.pop %v196
    %v198 = vmul.f32 %v195, 1.442695
    %v199 = vpow.pop %v198
    %v200 = vadd.f32 %v197, 1.0
    %v201 = vadd.f32 %v199, 1.0
    %v202 = vrcp.pop %v200
    %v203 = vmul.f32 %v200, %v202
    %v204 = vsub.f32 1.0, %v203
    %v205 = vmul.f32 %v202, %v204
    %v206 = vadd.f32 %v202, %v205
    %vm207 = vweird.f32 %v200
    %vm208 = vweird.f32 %v202
    %vm209 = vmor %vm207, %vm208
    %v210 = vsel %vm209, %v202, %v206
    %v211 = vand.u32 2147483647, %v200
    %vm212 = vcmp.eq.f32.partialorder %v211, 8.507059e+37
    %v213 = vand.u32 %v200, 2147483648
    %v214 = vor.u32 1.1754944e-38, %v213
    %v215 = vsel %vm212, %v214, %v210
    %v216 = vmul.f32 1.0, %v215
    %v217 = vrcp.pop %v201
    %v218 = vmul.f32 %v201, %v217
    %v219 = vsub.f32 1.0, %v218
    %v220 = vmul.f32 %v217, %v219
    %v221 = vadd.f32 %v217, %v220
    %vm222 = vweird.f32 %v201
    %vm223 = vweird.f32 %v217
    %vm224 = vmor %vm222, %vm223
    %v225 = vsel %vm224, %v217, %v221
    %v226 = vand.u32 2147483647, %v201
    %vm227 = vcmp.eq.f32.partialorder %v226, 8.507059e+37
    %v228 = vand.u32 %v201, 2147483648
    %v229 = vor.u32 1.1754944e-38, %v228
    %v230 = vsel %vm227, %v229, %v225
    %v231 = vmul.f32 1.0, %v230
    %v232 = vperm.slane %v216, 0
    %v233 = vlaneseq
    %v234 = vshrl.u32 %v233, 7
    %236 = vset.pattern.permute.xlu0 %v234
    %237 = vperm.xlu0 %236, %v232
    %v238 = vpop.permute.xlu0 %237
    %v239 = vlaneseq
    %v240 = vshrl.u32 %v239, 7
    %v241 = vadd.s32 %v240, 8
    %242 = vset.pattern.permute.xlu0 %v241
    %243 = vperm.xlu0 %242, %v232
    %v244 = vpop.permute.xlu0 %243
    %v245 = vlaneseq
    %v246 = vshrl.u32 %v245, 7
    %v247 = vadd.s32 %v246, 16
    %248 = vset.pattern.permute.xlu0 %v247
    %249 = vperm.xlu0 %248, %v232
    %v250 = vpop.permute.xlu0 %249
    %v251 = vlaneseq
    %v252 = vshrl.u32 %v251, 7
    %v253 = vadd.s32 %v252, 24
    %254 = vset.pattern.permute.xlu0 %v253
    %255 = vperm.xlu0 %254, %v232
    %v256 = vpop.permute.xlu0 %255
    %v257 = vperm.slane %v231, 0
    %v258 = vlaneseq
    %v259 = vshrl.u32 %v258, 7
    %261 = vset.pattern.permute.xlu0 %v259
    %262 = vperm.xlu0 %261, %v257
    %v263 = vpop.permute.xlu0 %262
    %v264 = vlaneseq
    %v265 = vshrl.u32 %v264, 7
    %v266 = vadd.s32 %v265, 8
    %267 = vset.pattern.permute.xlu0 %v266
    %268 = vperm.xlu0 %267, %v257
    %v269 = vpop.permute.xlu0 %268
    %v270 = vlaneseq
    %v271 = vshrl.u32 %v270, 7
    %v272 = vadd.s32 %v271, 16
    %273 = vset.pattern.permute.xlu0 %v272
    %274 = vperm.xlu0 %273, %v257
    %v275 = vpop.permute.xlu0 %274
    %v276 = vlaneseq
    %v277 = vshrl.u32 %v276, 7
    %v278 = vadd.s32 %v277, 24
    %279 = vset.pattern.permute.xlu0 %v278
    %280 = vperm.xlu0 %279, %v257
    %v281 = vpop.permute.xlu0 %280
    %v282 = vmul.f32 %v61, %v238
    %v283 = vmul.f32 %v62, %v238
    %v284 = vmul.f32 %v63, %v244
    %v285 = vmul.f32 %v64, %v244
    %v286 = vmul.f32 %v65, %v250
    %v287 = vmul.f32 %v66, %v250
    %v288 = vmul.f32 %v67, %v256
    %v289 = vmul.f32 %v68, %v256
    %v290 = vmul.f32 %v69, %v263
    %v291 = vmul.f32 %v70, %v263
    %v292 = vmul.f32 %v71, %v269
    %v293 = vmul.f32 %v72, %v269
    %v294 = vmul.f32 %v73, %v275
    %v295 = vmul.f32 %v74, %v275
    %v296 = vmul.f32 %v75, %v281
    %v297 = vmul.f32 %v76, %v281
    %v298 = vmax.f32 %v282, %v284
    %v299 = vmax.f32 %v298, %v286
    %v300 = vmax.f32 %v299, %v288
    %v301 = vrot.slane %v300, 4
    %v302 = vmax.f32 %v300, %v301
    %v303 = vrot.slane %v302, 2
    %v304 = vmax.f32 %v302, %v303
    %v305 = vrot.slane %v304, 1
    %v306 = vmax.f32 %v304, %v305
    %v307 = vmax.f32 %v283, %v285
    %v308 = vmax.f32 %v307, %v287
    %v309 = vmax.f32 %v308, %v289
    %v310 = vrot.slane %v309, 4
    %v311 = vmax.f32 %v309, %v310
    %v312 = vrot.slane %v311, 2
    %v313 = vmax.f32 %v311, %v312
    %v314 = vrot.slane %v313, 1
    %v315 = vmax.f32 %v313, %v314
    %v316 = vmax.f32 %v290, %v292
    %v317 = vmax.f32 %v316, %v294
    %v318 = vmax.f32 %v317, %v296
    %v319 = vrot.slane %v318, 4
    %v320 = vmax.f32 %v318, %v319
    %v321 = vrot.slane %v320, 2
    %v322 = vmax.f32 %v320, %v321
    %v323 = vrot.slane %v322, 1
    %v324 = vmax.f32 %v322, %v323
    %v325 = vmax.f32 %v291, %v293
    %v326 = vmax.f32 %v325, %v295
    %v327 = vmax.f32 %v326, %v297
    %v328 = vrot.slane %v327, 4
    %v329 = vmax.f32 %v327, %v328
    %v330 = vrot.slane %v329, 2
    %v331 = vmax.f32 %v329, %v330
    %v332 = vrot.slane %v331, 1
    %v333 = vmax.f32 %v331, %v332
    %v334 = vadd.f32 %v282, %v284
    %v335 = vadd.f32 %v334, %v286
    %v336 = vadd.f32 %v335, %v288
    %v337 = vrot.slane %v336, 4
    %v338 = vadd.f32 %v336, %v337
    %v339 = vrot.slane %v338, 2
    %v340 = vadd.f32 %v338, %v339
    %v341 = vrot.slane %v340, 1
    %v342 = vadd.f32 %v340, %v341
    %v343 = vadd.f32 %v283, %v285
    %v344 = vadd.f32 %v343, %v287
    %v345 = vadd.f32 %v344, %v289
    %v346 = vrot.slane %v345, 4
    %v347 = vadd.f32 %v345, %v346
    %v348 = vrot.slane %v347, 2
    %v349 = vadd.f32 %v347, %v348
    %v350 = vrot.slane %v349, 1
    %v351 = vadd.f32 %v349, %v350
    %v352 = vadd.f32 %v290, %v292
    %v353 = vadd.f32 %v352, %v294
    %v354 = vadd.f32 %v353, %v296
    %v355 = vrot.slane %v354, 4
    %v356 = vadd.f32 %v354, %v355
    %v357 = vrot.slane %v356, 2
    %v358 = vadd.f32 %v356, %v357
    %v359 = vrot.slane %v358, 1
    %v360 = vadd.f32 %v358, %v359
    %v361 = vadd.f32 %v291, %v293
    %v362 = vadd.f32 %v361, %v295
    %v363 = vadd.f32 %v362, %v297
    %v364 = vrot.slane %v363, 4
    %v365 = vadd.f32 %v363, %v364
    %v366 = vrot.slane %v365, 2
    %v367 = vadd.f32 %v365, %v366
    %v368 = vrot.slane %v367, 1
    %v369 = vadd.f32 %v367, %v368
    %v370 = vmul.f32 %v342, 0.03125
    %v371 = vmul.f32 %v351, 0.03125
    %v372 = vmul.f32 %v360, 0.03125
    %v373 = vmul.f32 %v369, 0.03125
    %vm378 = vcmask 1041409
    %v379 = vsel %vm378, %v324, %v306
    %v380 = vsel %vm378, %v333, %v315
    %v387 = vsel %vm378, %v372, %v370
    %v388 = vsel %vm378, %v373, %v371
    %v391 = vpack.c.bf16 %v379, %v379
    %v392 = vpack.c.bf16 %v380, %v380
    %v393 = vpack.c.bf16 %v387, %v387
    %v394 = vpack.c.bf16 %v388, %v388
    %v395 = vld [vmem:[#allocation6] sm:$0xff]
    %v396 = vld [vmem:[#allocation6 + $0x8] sm:$0xff]
    %v397 = vld [vmem:[#allocation6 + $0x10] sm:$0xff]
    %v398 = vld [vmem:[#allocation6 + $0x18] sm:$0xff]
    %v399 = vld [vmem:[#allocation6 + $0x20] sm:$0xff]
    %v400 = vld [vmem:[#allocation6 + $0x28] sm:$0xff]
    %v401 = vld [vmem:[#allocation6 + $0x30] sm:$0xff]
    %v402 = vld [vmem:[#allocation6 + $0x38] sm:$0xff]
    %v403 = vld [vmem:[#allocation6 + $0x40] sm:$0xff]
    %v404 = vld [vmem:[#allocation6 + $0x48] sm:$0xff]
    %v405 = vld [vmem:[#allocation6 + $0x50] sm:$0xff]
    %v406 = vld [vmem:[#allocation6 + $0x58] sm:$0xff]
    %v407 = vld [vmem:[#allocation6 + $0x60] sm:$0xff]
    %v408 = vld [vmem:[#allocation6 + $0x68] sm:$0xff]
    %v409 = vld [vmem:[#allocation6 + $0x70] sm:$0xff]
    %v410 = vld [vmem:[#allocation6 + $0x78] sm:$0xff]
    %v411 = vld [vmem:[#allocation6 + $0x80] sm:$0xff]
    %v412 = vld [vmem:[#allocation6 + $0x88] sm:$0xff]
    %v413 = vld [vmem:[#allocation6 + $0x90] sm:$0xff]
    %v414 = vld [vmem:[#allocation6 + $0x98] sm:$0xff]
    %v415 = vld [vmem:[#allocation6 + $0xa0] sm:$0xff]
    %v416 = vld [vmem:[#allocation6 + $0xa8] sm:$0xff]
    %v417 = vld [vmem:[#allocation6 + $0xb0] sm:$0xff]
    %v418 = vld [vmem:[#allocation6 + $0xb8] sm:$0xff]
    %v419 = vld [vmem:[#allocation6 + $0xc0] sm:$0xff]
    %v420 = vld [vmem:[#allocation6 + $0xc8] sm:$0xff]
    %v421 = vld [vmem:[#allocation6 + $0xd0] sm:$0xff]
    %v422 = vld [vmem:[#allocation6 + $0xd8] sm:$0xff]
    %v423 = vld [vmem:[#allocation6 + $0xe0] sm:$0xff]
    %v424 = vld [vmem:[#allocation6 + $0xe8] sm:$0xff]
    %v425 = vld [vmem:[#allocation6 + $0xf0] sm:$0xff]
    %v426 = vld [vmem:[#allocation6 + $0xf8] sm:$0xff]
    %v427 = vld [vmem:[#allocation6 + $0x100] sm:$0xff]
    %v428 = vld [vmem:[#allocation6 + $0x108] sm:$0xff]
    %v429 = vld [vmem:[#allocation6 + $0x110] sm:$0xff]
    %v430 = vld [vmem:[#allocation6 + $0x118] sm:$0xff]
    %v431 = vld [vmem:[#allocation6 + $0x120] sm:$0xff]
    %v432 = vld [vmem:[#allocation6 + $0x128] sm:$0xff]
    %v433 = vld [vmem:[#allocation6 + $0x130] sm:$0xff]
    %v434 = vld [vmem:[#allocation6 + $0x138] sm:$0xff]
    %v435 = vld [vmem:[#allocation6 + $0x140] sm:$0xff]
    %v436 = vld [vmem:[#allocation6 + $0x148] sm:$0xff]
    %v437 = vld [vmem:[#allocation6 + $0x150] sm:$0xff]
    %v438 = vld [vmem:[#allocation6 + $0x158] sm:$0xff]
    %v439 = vld [vmem:[#allocation6 + $0x160] sm:$0xff]
    %v440 = vld [vmem:[#allocation6 + $0x168] sm:$0xff]
    %v441 = vld [vmem:[#allocation6 + $0x170] sm:$0xff]
    %v442 = vld [vmem:[#allocation6 + $0x178] sm:$0xff]
    %v443 = vld [vmem:[#allocation6 + $0x180] sm:$0xff]
    %v444 = vld [vmem:[#allocation6 + $0x188] sm:$0xff]
    %v445 = vld [vmem:[#allocation6 + $0x190] sm:$0xff]
    %v446 = vld [vmem:[#allocation6 + $0x198] sm:$0xff]
    %v447 = vld [vmem:[#allocation6 + $0x1a0] sm:$0xff]
    %v448 = vld [vmem:[#allocation6 + $0x1a8] sm:$0xff]
    %v449 = vld [vmem:[#allocation6 + $0x1b0] sm:$0xff]
    %v450 = vld [vmem:[#allocation6 + $0x1b8] sm:$0xff]
    %v451 = vld [vmem:[#allocation6 + $0x1c0] sm:$0xff]
    %v452 = vld [vmem:[#allocation6 + $0x1c8] sm:$0xff]
    %v453 = vld [vmem:[#allocation6 + $0x1d0] sm:$0xff]
    %v454 = vld [vmem:[#allocation6 + $0x1d8] sm:$0xff]
    %v455 = vld [vmem:[#allocation6 + $0x1e0] sm:$0xff]
    %v456 = vld [vmem:[#allocation6 + $0x1e8] sm:$0xff]
    %v457 = vld [vmem:[#allocation6 + $0x1f0] sm:$0xff]
    %v458 = vld [vmem:[#allocation6 + $0x1f8] sm:$0xff]
    %v459 = vld [vmem:[#allocation2] sm:$0x1]
    %v461 = vperm.slane %v459, 0
    %462 = vset.pattern.permute.xlu0 0
    %463 = vperm.xlu0 %462, %v461
    %v464 = vpop.permute.xlu0 %463
    %v530 = vunpack.c.l.b16 %v395
    %v531 = vunpack.c.h.b16 %v395
    %v532 = vunpack.c.l.b16 %v396
    %v533 = vunpack.c.h.b16 %v396
    %v534 = vunpack.c.l.b16 %v397
    %v535 = vunpack.c.h.b16 %v397
    %v536 = vunpack.c.l.b16 %v398
    %v537 = vunpack.c.h.b16 %v398
    %v538 = vunpack.c.l.b16 %v399
    %v539 = vunpack.c.h.b16 %v399
    %v540 = vunpack.c.l.b16 %v400
    %v541 = vunpack.c.h.b16 %v400
    %v542 = vunpack.c.l.b16 %v401
    %v543 = vunpack.c.h.b16 %v401
    %v544 = vunpack.c.l.b16 %v402
    %v545 = vunpack.c.h.b16 %v402
    %v546 = vunpack.c.l.b16 %v403
    %v547 = vunpack.c.h.b16 %v403
    %v548 = vunpack.c.l.b16 %v404
    %v549 = vunpack.c.h.b16 %v404
    %v550 = vunpack.c.l.b16 %v405
    %v551 = vunpack.c.h.b16 %v405
    %v552 = vunpack.c.l.b16 %v406
    %v553 = vunpack.c.h.b16 %v406
    %v554 = vunpack.c.l.b16 %v407
    %v555 = vunpack.c.h.b16 %v407
    %v556 = vunpack.c.l.b16 %v408
    %v557 = vunpack.c.h.b16 %v408
    %v558 = vunpack.c.l.b16 %v409
    %v559 = vunpack.c.h.b16 %v409
    %v560 = vunpack.c.l.b16 %v410
    %v561 = vunpack.c.h.b16 %v410
    %v562 = vunpack.c.l.b16 %v411
    %v563 = vunpack.c.h.b16 %v411
    %v564 = vunpack.c.l.b16 %v412
    %v565 = vunpack.c.h.b16 %v412
    %v566 = vunpack.c.l.b16 %v413
    %v567 = vunpack.c.h.b16 %v413
    %v568 = vunpack.c.l.b16 %v414
    %v569 = vunpack.c.h.b16 %v414
    %v570 = vunpack.c.l.b16 %v415
    %v571 = vunpack.c.h.b16 %v415
    %v572 = vunpack.c.l.b16 %v416
    %v573 = vunpack.c.h.b16 %v416
    %v574 = vunpack.c.l.b16 %v417
    %v575 = vunpack.c.h.b16 %v417
    %v576 = vunpack.c.l.b16 %v418
    %v577 = vunpack.c.h.b16 %v418
    %v578 = vunpack.c.l.b16 %v419
    %v579 = vunpack.c.h.b16 %v419
    %v580 = vunpack.c.l.b16 %v420
    %v581 = vunpack.c.h.b16 %v420
    %v582 = vunpack.c.l.b16 %v421
    %v583 = vunpack.c.h.b16 %v421
    %v584 = vunpack.c.l.b16 %v422
    %v585 = vunpack.c.h.b16 %v422
    %v586 = vunpack.c.l.b16 %v423
    %v587 = vunpack.c.h.b16 %v423
    %v588 = vunpack.c.l.b16 %v424
    %v589 = vunpack.c.h.b16 %v424
    %v590 = vunpack.c.l.b16 %v425
    %v591 = vunpack.c.h.b16 %v425
    %v592 = vunpack.c.l.b16 %v426
    %v593 = vunpack.c.h.b16 %v426
    %v594 = vunpack.c.l.b16 %v427
    %v595 = vunpack.c.h.b16 %v427
    %v596 = vunpack.c.l.b16 %v428
    %v597 = vunpack.c.h.b16 %v428
    %v598 = vunpack.c.l.b16 %v429
    %v599 = vunpack.c.h.b16 %v429
    %v600 = vunpack.c.l.b16 %v430
    %v601 = vunpack.c.h.b16 %v430
    %v602 = vunpack.c.l.b16 %v431
    %v603 = vunpack.c.h.b16 %v431
    %v604 = vunpack.c.l.b16 %v432
    %v605 = vunpack.c.h.b16 %v432
    %v606 = vunpack.c.l.b16 %v433
    %v607 = vunpack.c.h.b16 %v433
    %v608 = vunpack.c.l.b16 %v434
    %v609 = vunpack.c.h.b16 %v434
    %v610 = vunpack.c.l.b16 %v435
    %v611 = vunpack.c.h.b16 %v435
    %v612 = vunpack.c.l.b16 %v436
    %v613 = vunpack.c.h.b16 %v436
    %v614 = vunpack.c.l.b16 %v437
    %v615 = vunpack.c.h.b16 %v437
    %v616 = vunpack.c.l.b16 %v438
    %v617 = vunpack.c.h.b16 %v438
    %v618 = vunpack.c.l.b16 %v439
    %v619 = vunpack.c.h.b16 %v439
    %v620 = vunpack.c.l.b16 %v440
    %v621 = vunpack.c.h.b16 %v440
    %v622 = vunpack.c.l.b16 %v441
    %v623 = vunpack.c.h.b16 %v441
    %v624 = vunpack.c.l.b16 %v442
    %v625 = vunpack.c.h.b16 %v442
    %v626 = vunpack.c.l.b16 %v443
    %v627 = vunpack.c.h.b16 %v443
    %v628 = vunpack.c.l.b16 %v444
    %v629 = vunpack.c.h.b16 %v444
    %v630 = vunpack.c.l.b16 %v445
    %v631 = vunpack.c.h.b16 %v445
    %v632 = vunpack.c.l.b16 %v446
    %v633 = vunpack.c.h.b16 %v446
    %v634 = vunpack.c.l.b16 %v447
    %v635 = vunpack.c.h.b16 %v447
    %v636 = vunpack.c.l.b16 %v448
    %v637 = vunpack.c.h.b16 %v448
    %v638 = vunpack.c.l.b16 %v449
    %v639 = vunpack.c.h.b16 %v449
    %v640 = vunpack.c.l.b16 %v450
    %v641 = vunpack.c.h.b16 %v450
    %v642 = vunpack.c.l.b16 %v451
    %v643 = vunpack.c.h.b16 %v451
    %v644 = vunpack.c.l.b16 %v452
    %v645 = vunpack.c.h.b16 %v452
    %v646 = vunpack.c.l.b16 %v453
    %v647 = vunpack.c.h.b16 %v453
    %v648 = vunpack.c.l.b16 %v454
    %v649 = vunpack.c.h.b16 %v454
    %v650 = vunpack.c.l.b16 %v455
    %v651 = vunpack.c.h.b16 %v455
    %v652 = vunpack.c.l.b16 %v456
    %v653 = vunpack.c.h.b16 %v456
    %v654 = vunpack.c.l.b16 %v457
    %v655 = vunpack.c.h.b16 %v457
    %v656 = vunpack.c.l.b16 %v458
    %v657 = vunpack.c.h.b16 %v458
    %v658 = vpack.c.b16 %v532, %v530
    %v659 = vpack.c.b16 %v533, %v531
    %v660 = vpack.c.b16 %v536, %v534
    %v661 = vpack.c.b16 %v537, %v535
    %v662 = vpack.c.b16 %v540, %v538
    %v663 = vpack.c.b16 %v541, %v539
    %v664 = vpack.c.b16 %v544, %v542
    %v665 = vpack.c.b16 %v545, %v543
    %v666 = vpack.c.b16 %v548, %v546
    %v667 = vpack.c.b16 %v549, %v547
    %v668 = vpack.c.b16 %v552, %v550
    %v669 = vpack.c.b16 %v553, %v551
    %v670 = vpack.c.b16 %v556, %v554
    %v671 = vpack.c.b16 %v557, %v555
    %v672 = vpack.c.b16 %v560, %v558
    %v673 = vpack.c.b16 %v561, %v559
    %v674 = vpack.c.b16 %v564, %v562
    %v675 = vpack.c.b16 %v565, %v563
    %v676 = vpack.c.b16 %v568, %v566
    %v677 = vpack.c.b16 %v569, %v567
    %v678 = vpack.c.b16 %v572, %v570
    %v679 = vpack.c.b16 %v573, %v571
    %v680 = vpack.c.b16 %v576, %v574
    %v681 = vpack.c.b16 %v577, %v575
    %v682 = vpack.c.b16 %v580, %v578
    %v683 = vpack.c.b16 %v581, %v579
    %v684 = vpack.c.b16 %v584, %v582
    %v685 = vpack.c.b16 %v585, %v583
    %v686 = vpack.c.b16 %v588, %v586
    %v687 = vpack.c.b16 %v589, %v587
    %v688 = vpack.c.b16 %v592, %v590
    %v689 = vpack.c.b16 %v593, %v591
    %v690 = vpack.c.b16 %v596, %v594
    %v691 = vpack.c.b16 %v597, %v595
    %v692 = vpack.c.b16 %v600, %v598
    %v693 = vpack.c.b16 %v601, %v599
    %v694 = vpack.c.b16 %v604, %v602
    %v695 = vpack.c.b16 %v605, %v603
    %v696 = vpack.c.b16 %v608, %v606
    %v697 = vpack.c.b16 %v609, %v607
    %v698 = vpack.c.b16 %v612, %v610
    %v699 = vpack.c.b16 %v613, %v611
    %v700 = vpack.c.b16 %v616, %v614
    %v701 = vpack.c.b16 %v617, %v615
    %v702 = vpack.c.b16 %v620, %v618
    %v703 = vpack.c.b16 %v621, %v619
    %v704 = vpack.c.b16 %v624, %v622
    %v705 = vpack.c.b16 %v625, %v623
    %v706 = vpack.c.b16 %v628, %v626
    %v707 = vpack.c.b16 %v629, %v627
    %v708 = vpack.c.b16 %v632, %v630
    %v709 = vpack.c.b16 %v633, %v631
    %v710 = vpack.c.b16 %v636, %v634
    %v711 = vpack.c.b16 %v637, %v635
    %v712 = vpack.c.b16 %v640, %v638
    %v713 = vpack.c.b16 %v641, %v639
    %v714 = vpack.c.b16 %v644, %v642
    %v715 = vpack.c.b16 %v645, %v643
    %v716 = vpack.c.b16 %v648, %v646
    %v717 = vpack.c.b16 %v649, %v647
    %v718 = vpack.c.b16 %v652, %v650
    %v719 = vpack.c.b16 %v653, %v651
    %v720 = vpack.c.b16 %v656, %v654
    %v721 = vpack.c.b16 %v657, %v655
    %786 = vmatpush.bf16.msra.mxu0 %v672
    %787 = vmatpush.bf16.msra.mxu0 %v670
    %788 = vmatpush.bf16.msra.mxu0 %v668
    %789 = vmatpush.bf16.msra.mxu0 %v666
    %790 = vmatpush.bf16.msra.mxu0 %v664
    %791 = vmatpush.bf16.msra.mxu0 %v662
    %792 = vmatpush.bf16.msra.mxu0 %v660
    %793 = vmatpush.bf16.msra.mxu0 %v658
    %794 = vmatmul.bf16.gmra.mxu0 %v391
    %v795 = vpop.f32.mrf.mxu0
    %v796 = vadd.f32 %v464, %v795
    %v797 = vpop.f32.mrf.mxu0
    %798 = vdwg.mxu0
    %799 = vmatpush.bf16.msra.mxu0 %v688
    %800 = vmatpush.bf16.msra.mxu0 %v686
    %801 = vmatpush.bf16.msra.mxu0 %v684
    %802 = vmatpush.bf16.msra.mxu0 %v682
    %803 = vmatpush.bf16.msra.mxu0 %v680
    %804 = vmatpush.bf16.msra.mxu0 %v678
    %805 = vmatpush.bf16.msra.mxu0 %v676
    %806 = vmatpush.bf16.msra.mxu0 %v674
    %807 = vmatmul.bf16.gmra.mxu0 %v392
    %v808 = vpop.f32.mrf.mxu0
    %v809 = vadd.f32 %v796, %v808
    %v810 = vpop.f32.mrf.mxu0
    %811 = vdwg.mxu0
    %812 = vmatpush.bf16.msra.mxu0 %v704
    %813 = vmatpush.bf16.msra.mxu0 %v702
    %814 = vmatpush.bf16.msra.mxu0 %v700
    %815 = vmatpush.bf16.msra.mxu0 %v698
    %816 = vmatpush.bf16.msra.mxu0 %v696
    %817 = vmatpush.bf16.msra.mxu0 %v694
    %818 = vmatpush.bf16.msra.mxu0 %v692
    %819 = vmatpush.bf16.msra.mxu0 %v690
    %820 = vmatmul.bf16.gmra.mxu0 %v393
    %v821 = vpop.f32.mrf.mxu0
    %v822 = vadd.f32 %v809, %v821
    %v823 = vpop.f32.mrf.mxu0
    %824 = vdwg.mxu0
    %825 = vmatpush.bf16.msra.mxu0 %v720
    %826 = vmatpush.bf16.msra.mxu0 %v718
    %827 = vmatpush.bf16.msra.mxu0 %v716
    %828 = vmatpush.bf16.msra.mxu0 %v714
    %829 = vmatpush.bf16.msra.mxu0 %v712
    %830 = vmatpush.bf16.msra.mxu0 %v710
    %831 = vmatpush.bf16.msra.mxu0 %v708
    %832 = vmatpush.bf16.msra.mxu0 %v706
    %833 = vmatmul.bf16.gmra.mxu0 %v394
    %v834 = vpop.f32.mrf.mxu0
    %v835 = vadd.f32 %v822, %v834
    %v836 = vpop.f32.mrf.mxu0
    %837 = vdwg.mxu0
    %838 = vmatpush.bf16.msra.mxu0 %v673
    %839 = vmatpush.bf16.msra.mxu0 %v671
    %840 = vmatpush.bf16.msra.mxu0 %v669
    %841 = vmatpush.bf16.msra.mxu0 %v667
    %842 = vmatpush.bf16.msra.mxu0 %v665
    %843 = vmatpush.bf16.msra.mxu0 %v663
    %844 = vmatpush.bf16.msra.mxu0 %v661
    %845 = vmatpush.bf16.msra.mxu0 %v659
    %846 = vmatmul.bf16.gmra.mxu0 %v391
    %v847 = vpop.f32.mrf.mxu0
    %v848 = vadd.f32 %v464, %v847
    %v849 = vpop.f32.mrf.mxu0
    %850 = vdwg.mxu0
    %851 = vmatpush.bf16.msra.mxu0 %v689
    %852 = vmatpush.bf16.msra.mxu0 %v687
    %853 = vmatpush.bf16.msra.mxu0 %v685
    %854 = vmatpush.bf16.msra.mxu0 %v683
    %855 = vmatpush.bf16.msra.mxu0 %v681
    %856 = vmatpush.bf16.msra.mxu0 %v679
    %857 = vmatpush.bf16.msra.mxu0 %v677
    %858 = vmatpush.bf16.msra.mxu0 %v675
    %859 = vmatmul.bf16.gmra.mxu0 %v392
    %v860 = vpop.f32.mrf.mxu0
    %v861 = vadd.f32 %v848, %v860
    %v862 = vpop.f32.mrf.mxu0
    %863 = vdwg.mxu0
    %864 = vmatpush.bf16.msra.mxu0 %v705
    %865 = vmatpush.bf16.msra.mxu0 %v703
    %866 = vmatpush.bf16.msra.mxu0 %v701
    %867 = vmatpush.bf16.msra.mxu0 %v699
    %868 = vmatpush.bf16.msra.mxu0 %v697
    %869 = vmatpush.bf16.msra.mxu0 %v695
    %870 = vmatpush.bf16.msra.mxu0 %v693
    %871 = vmatpush.bf16.msra.mxu0 %v691
    %872 = vmatmul.bf16.gmra.mxu0 %v393
    %v873 = vpop.f32.mrf.mxu0
    %v874 = vadd.f32 %v861, %v873
    %v875 = vpop.f32.mrf.mxu0
    %876 = vdwg.mxu0
    %877 = vmatpush.bf16.msra.mxu0 %v721
    %878 = vmatpush.bf16.msra.mxu0 %v719
    %879 = vmatpush.bf16.msra.mxu0 %v717
    %880 = vmatpush.bf16.msra.mxu0 %v715
    %881 = vmatpush.bf16.msra.mxu0 %v713
    %882 = vmatpush.bf16.msra.mxu0 %v711
    %883 = vmatpush.bf16.msra.mxu0 %v709
    %884 = vmatpush.bf16.msra.mxu0 %v707
    %885 = vmatmul.bf16.gmra.mxu0 %v394
    %v886 = vpop.f32.mrf.mxu0
    %v887 = vadd.f32 %v874, %v886
    %v888 = vpop.f32.mrf.mxu0
    %889 = vdwg.mxu0
    %v890 = vxor.u32 %v835, 2147483648
    %v891 = vxor.u32 %v887, 2147483648
    %v892 = vmul.f32 %v890, 1.442695
    %v893 = vpow.pop %v892
    %v894 = vmul.f32 %v891, 1.442695
    %v895 = vpow.pop %v894
    %v896 = vadd.f32 %v893, 1.0
    %v897 = vadd.f32 %v895, 1.0
    %v898 = vrcp.pop %v896
    %v899 = vmul.f32 %v896, %v898
    %v900 = vsub.f32 1.0, %v899
    %v901 = vmul.f32 %v898, %v900
    %v902 = vadd.f32 %v898, %v901
    %vm903 = vweird.f32 %v896
    %vm904 = vweird.f32 %v898
    %vm905 = vmor %vm903, %vm904
    %v906 = vsel %vm905, %v898, %v902
    %v907 = vand.u32 2147483647, %v896
    %vm908 = vcmp.eq.f32.partialorder %v907, 8.507059e+37
    %v909 = vand.u32 %v896, 2147483648
    %v910 = vor.u32 1.1754944e-38, %v909
    %v911 = vsel %vm908, %v910, %v906
    %v912 = vmul.f32 1.0, %v911
    %v913 = vrcp.pop %v897
    %v914 = vmul.f32 %v897, %v913
    %v915 = vsub.f32 1.0, %v914
    %v916 = vmul.f32 %v913, %v915
    %v917 = vadd.f32 %v913, %v916
    %vm918 = vweird.f32 %v897
    %vm919 = vweird.f32 %v913
    %vm920 = vmor %vm918, %vm919
    %v921 = vsel %vm920, %v913, %v917
    %v922 = vand.u32 2147483647, %v897
    %vm923 = vcmp.eq.f32.partialorder %v922, 8.507059e+37
    %v924 = vand.u32 %v897, 2147483648
    %v925 = vor.u32 1.1754944e-38, %v924
    %v926 = vsel %vm923, %v925, %v921
    %v927 = vmul.f32 1.0, %v926
    %v930 = vrot.slane %v927, 7
    %vm931 = vcmask 1040384
    %v932 = vsel %vm931, %v912, %v930
    %v933 = vsel %vm378, %v912, %v930
    %v934 = vrot.slane %v933, 1
    %v935 = vperm.slane %v932, 0
    %v936 = vperm.slane %v932, 1
    %v937 = vperm.slane %v934, 0
    %v938 = vperm.slane %v934, 1
    %v943 = vmul.f32 %v282, %v935
    %v944 = vmul.f32 %v283, %v936
    %v945 = vmul.f32 %v284, %v935
    %v946 = vmul.f32 %v285, %v936
    %v947 = vmul.f32 %v286, %v935
    %v948 = vmul.f32 %v287, %v936
    %v949 = vmul.f32 %v288, %v935
    %v950 = vmul.f32 %v289, %v936
    %v951 = vmul.f32 %v290, %v937
    %v952 = vmul.f32 %v291, %v938
    %v953 = vmul.f32 %v292, %v937
    %v954 = vmul.f32 %v293, %v938
    %v955 = vmul.f32 %v294, %v937
    %v956 = vmul.f32 %v295, %v938
    %v957 = vmul.f32 %v296, %v937
    %v958 = vmul.f32 %v297, %v938
    %959 = vst [vmem:[#allocation8] sm:$0xff] %v943
    %960 = vst [vmem:[#allocation8 + $0x8] sm:$0xff] %v944
    %961 = vst [vmem:[#allocation8 + $0x10] sm:$0xff] %v945
    %962 = vst [vmem:[#allocation8 + $0x18] sm:$0xff] %v946
    %963 = vst [vmem:[#allocation8 + $0x20] sm:$0xff] %v947
    %964 = vst [vmem:[#allocation8 + $0x28] sm:$0xff] %v948
    %965 = vst [vmem:[#allocation8 + $0x30] sm:$0xff] %v949
    %966 = vst [vmem:[#allocation8 + $0x38] sm:$0xff] %v950
    %967 = vst [vmem:[#allocation8 + $0x40] sm:$0xff] %v951
    %968 = vst [vmem:[#allocation8 + $0x48] sm:$0xff] %v952
    %969 = vst [vmem:[#allocation8 + $0x50] sm:$0xff] %v953
    %970 = vst [vmem:[#allocation8 + $0x58] sm:$0xff] %v954
    %971 = vst [vmem:[#allocation8 + $0x60] sm:$0xff] %v955
    %972 = vst [vmem:[#allocation8 + $0x68] sm:$0xff] %v956
    %973 = vst [vmem:[#allocation8 + $0x70] sm:$0xff] %v957
    %974 = vst [vmem:[#allocation8 + $0x78] sm:$0xff] %v958
    // Predicated region
    $region38: #{tpu_custom_call.1} parent=1 // pred_check
      _
    $region39: #{tpu_custom_call.1} parent=1 // pred_check_branch
      %976 = sbr.rel (0) target = $region41
    $region40: #{tpu_custom_call.1} parent=1 // pred_region
      %978 = vsyncadd [#allocation5], 0
      %s979 = sshll.u32 [#allocation8], 4
      %s980 = int_to_ptr.vmem [resolvable:$true] %s979
      %s981 = sshll.u32 %s7, 4
      %s982 = int_to_ptr.hbm [resolvable:$true] %s981
      %987 = dma.vmem_to_hbm [thread:$0]  %s980, 2048, %s982, [#allocation5], 256, 256, 16
    $region41: #{tpu_custom_call.1} parent=1 // pred_fallthru
      _
    // Predicated region
    $region42: #{tpu_custom_call.1} parent=1 // pred_check
      _
    $region43: #{tpu_custom_call.1} parent=1 // pred_check_branch
      %989 = sbr.rel (0) target = $region45
    $region44: #{tpu_custom_call.1} parent=1 // pred_region
      %991 = dma.done [#allocation5], 2048
    $region45: #{tpu_custom_call.1} parent=1 // pred_fallthru
      _
    %992 = vsyncpa [#allocation4], 1
    %993 = vsyncpa [#allocation7], 1
    %994 = vsyncpa [#allocation5], 1

</llo_original>
